<compile_context>
chip_gen: v6e
topology: v6e:2x2x1
jax: 0.10.0
libtpu: 0.0.40
codegen_flags: <defaults>
</compile_context>

<pallas_src>
import jax
import jax.numpy as jnp
from jax.experimental import pallas as pl
from jax.experimental.pallas import tpu as pltpu


LANE = 128
NEG_PAD = -1e30  # fill value for padded classifier-bias lanes


def _round_up(v, m):
    return ((v + m - 1) // m) * m


def brainnn_kernel(a_ref, x_ref, pool_ref, w1_ref, b1_ref, w2_ref, b2_ref,
                   wc_ref, bc_ref, out_ref):
    # Per-graph blocks (grid axis 0 = graph index).
    a = a_ref[0]                                  # [N_pad, N_pad] bf16
    x = x_ref[0]                                  # [N_pad, F_pad] bf16

    # GNN layer 1: relu(A @ (X @ W1) + b1)   ((X@W1)-first association)
    xw = jnp.dot(x, w1_ref[...], preferred_element_type=jnp.float32)
    h = jnp.dot(a, xw.astype(jnp.bfloat16), preferred_element_type=jnp.float32)
    h = jnp.maximum(h + b1_ref[...], 0.0)         # f32 elementwise (v5e-safe)

    # GNN layer 2: relu((A @ H) @ W2 + b2)
    ah = jnp.dot(a, h.astype(jnp.bfloat16), preferred_element_type=jnp.float32)
    h2 = jnp.dot(ah.astype(jnp.bfloat16), w2_ref[...],
                 preferred_element_type=jnp.float32)
    h2 = jnp.maximum(h2 + b2_ref[...], 0.0)

    # Mean pool over true nodes, expressed as a matmul with a masked 1/N row.
    pooled = jnp.dot(pool_ref[...], h2.astype(jnp.bfloat16),
                     preferred_element_type=jnp.float32)   # [1, H_pad]

    # Classifier head; padded class lanes are pinned to -1e30 via bc padding.
    g = jnp.dot(pooled.astype(jnp.bfloat16), wc_ref[...],
                preferred_element_type=jnp.float32) + bc_ref[...]  # [1, C_pad]

    # Stable log_softmax over the (lane-dense) class axis.
    m = jnp.max(g, axis=-1, keepdims=True)
    lse = jnp.log(jnp.sum(jnp.exp(g - m), axis=-1, keepdims=True)) + m
    out_ref[...] = (g - lse).reshape(1, 1, -1)


@jax.jit
def brainnn_forward(x, edge_index, edge_attr, params):
    """Batched forward: x [B,N,F], edge_index [B,2,E], edge_attr [B,E]."""
    w1, b1, w2, b2, wc, bc = params
    B, N, F = x.shape
    H = w1.shape[1]
    C = wc.shape[1]

    N_pad = _round_up(N, LANE)
    F_pad = _round_up(F, LANE)
    H_pad = _round_up(H, LANE)
    C_pad = _round_up(C, LANE)

    # --- Dense adjacency via one-hot einsum (MXU-friendly, no scatter). ---
    # adj[b, dst, src] = sum of edge_attr over duplicate edges (+ self loops).
    dst_oh = jax.nn.one_hot(edge_index[:, 0, :], N_pad, dtype=jnp.float32)
    src_oh = jax.nn.one_hot(edge_index[:, 1, :], N_pad, dtype=jnp.float32)
    adj = jnp.einsum('ben,be,bem->bnm', dst_oh, edge_attr, src_oh)
    eye = jnp.pad(jnp.eye(N, dtype=jnp.float32),
                  ((0, N_pad - N), (0, N_pad - N)))
    adj = (adj + eye[None]).astype(jnp.bfloat16)          # [B, N_pad, N_pad]

    # --- Zero-pad activations / weights to lane-dense shapes. ---
    x_p = jnp.pad(x, ((0, 0), (0, N_pad - N), (0, F_pad - F))
                  ).astype(jnp.bfloat16)                   # [B, N_pad, F_pad]
    w1_p = jnp.pad(w1, ((0, F_pad - F), (0, H_pad - H))).astype(jnp.bfloat16)
    w2_p = jnp.pad(w2, ((0, H_pad - H), (0, H_pad - H))).astype(jnp.bfloat16)
    wc_p = jnp.pad(wc, ((0, H_pad - H), (0, C_pad - C))).astype(jnp.bfloat16)
    b1_p = jnp.pad(b1, ((0, 0), (0, H_pad - H)))                     # f32
    b2_p = jnp.pad(b2, ((0, 0), (0, H_pad - H)))                     # f32
    bc_p = jnp.pad(bc, ((0, 0), (0, C_pad - C)),
                   constant_values=NEG_PAD)                           # f32

    # Masked mean-pool row vector: 1/N for true nodes, 0 for padding.
    node_ids = jnp.arange(N_pad)[None, :]
    pool_vec = jnp.where(node_ids < N, 1.0 / N, 0.0).astype(jnp.bfloat16)

    out = pl.pallas_call(
        brainnn_kernel,
        out_shape=jax.ShapeDtypeStruct((B, 1, C_pad), jnp.float32),
        grid=(B,),
        in_specs=[
            # Per-graph blocks.
            pl.BlockSpec((1, N_pad, N_pad), lambda b: (b, 0, 0)),   # adj
            pl.BlockSpec((1, N_pad, F_pad), lambda b: (b, 0, 0)),   # x
            # Resident (constant-index) blocks: no re-DMA across graphs.
            pl.BlockSpec((1, N_pad), lambda b: (0, 0)),             # pool_vec
            pl.BlockSpec((F_pad, H_pad), lambda b: (0, 0)),         # w1
            pl.BlockSpec((1, H_pad), lambda b: (0, 0)),             # b1
            pl.BlockSpec((H_pad, H_pad), lambda b: (0, 0)),         # w2
            pl.BlockSpec((1, H_pad), lambda b: (0, 0)),             # b2
            pl.BlockSpec((H_pad, C_pad), lambda b: (0, 0)),         # wc
            pl.BlockSpec((1, C_pad), lambda b: (0, 0)),             # bc
        ],
        out_specs=pl.BlockSpec((1, 1, C_pad), lambda b: (b, 0, 0)),
        compiler_params=pltpu.CompilerParams(
            dimension_semantics=("parallel",),        # shards graphs on v7x's 2 TCs
            vmem_limit_bytes=32 * 1024 * 1024,        # safe on 64 MiB (v7x) VMEM
        ),
    )(adj, x_p, pool_vec, w1_p, b1_p, w2_p, b2_p, wc_p, bc_p)

    # Drop lane padding -> [B, C] log-probs.
    return out.reshape(B, C_pad)[:, :C]


def init_params(key, f_in, hidden, num_classes):
    k1, k2, k3 = jax.random.split(key, 3)
    w1 = jax.random.normal(k1, (f_in, hidden), jnp.float32) * 0.1
    b1 = jnp.zeros((1, hidden), jnp.float32)
    w2 = jax.random.normal(k2, (hidden, hidden), jnp.float32) * 0.1
    b2 = jnp.zeros((1, hidden), jnp.float32)
    wc = jax.random.normal(k3, (hidden, num_classes), jnp.float32) * 0.1
    bc = jnp.zeros((1, num_classes), jnp.float32)
    return (w1, b1, w2, b2, wc, bc)


if __name__ == "__main__":
    key = jax.random.PRNGKey(0)
    k_x, k_src, k_dst, k_attr, k_param = jax.random.split(key, 5)

    B, N, F_IN, HIDDEN, NUM_CLASSES, E = 8, 16, 16, 32, 2, 48

    x = jax.random.normal(k_x, (B, N, F_IN), jnp.float32)
    edge_index = jnp.stack([
        jax.random.randint(k_src, (B, E), 0, N, jnp.int32),   # dst
        jax.random.randint(k_dst, (B, E), 0, N, jnp.int32),   # src
    ], axis=1)                                                 # [B, 2, E]
    edge_attr = jax.random.uniform(k_attr, (B, E), jnp.float32)

    params = init_params(k_param, F_IN, HIDDEN, NUM_CLASSES)

    log_logits = brainnn_forward(x, edge_index, edge_attr, params)
    jax.block_until_ready(log_logits)

    # Sanity: per-graph log_softmax rows should sum (in prob space) to ~1.
    assert log_logits.shape == (B, NUM_CLASSES)
    prob_sums = jnp.sum(jnp.exp(log_logits), axis=-1)
    assert bool(jnp.all(jnp.isfinite(log_logits)))
    assert bool(jnp.all(jnp.abs(prob_sums - 1.0) < 1e-3))
    print("KERNEL_OK")
</pallas_src>

<mosaic_0001>
module attributes {stable_mosaic.version = 11 : i64} {
  func.func @brainnn_kernel(%arg0: i32, %arg1: memref<1x128x128xbf16, #tpu.memory_space<vmem>>, %arg2: memref<1x128x128xbf16, #tpu.memory_space<vmem>>, %arg3: memref<1x128xbf16, #tpu.memory_space<vmem>>, %arg4: memref<128x128xbf16, #tpu.memory_space<vmem>>, %arg5: memref<1x128xf32, #tpu.memory_space<vmem>>, %arg6: memref<128x128xbf16, #tpu.memory_space<vmem>>, %arg7: memref<1x128xf32, #tpu.memory_space<vmem>>, %arg8: memref<128x128xbf16, #tpu.memory_space<vmem>>, %arg9: memref<1x128xf32, #tpu.memory_space<vmem>>, %arg10: memref<1x1x128xf32, #tpu.memory_space<vmem>>) attributes {dimension_semantics = [#tpu.dimension_semantics<parallel>], iteration_bounds = array<i64: 8>, scalar_prefetch = 0 : i64, scratch_operands = 0 : i64, tpu.core_type = #tpu.core_type<tc>, window_params = [{transform_indices = @transform_0, window_bounds = array<i64: 1, 128, 128>}, {transform_indices = @transform_1, window_bounds = array<i64: 1, 128, 128>}, {pipeline_mode = #tpu.pipeline_mode<synchronous>, transform_indices = @transform_2, window_bounds = array<i64: 1, 128>}, {pipeline_mode = #tpu.pipeline_mode<synchronous>, transform_indices = @transform_3, window_bounds = array<i64: 128, 128>}, {pipeline_mode = #tpu.pipeline_mode<synchronous>, transform_indices = @transform_4, window_bounds = array<i64: 1, 128>}, {pipeline_mode = #tpu.pipeline_mode<synchronous>, transform_indices = @transform_5, window_bounds = array<i64: 128, 128>}, {pipeline_mode = #tpu.pipeline_mode<synchronous>, transform_indices = @transform_6, window_bounds = array<i64: 1, 128>}, {pipeline_mode = #tpu.pipeline_mode<synchronous>, transform_indices = @transform_7, window_bounds = array<i64: 128, 128>}, {pipeline_mode = #tpu.pipeline_mode<synchronous>, transform_indices = @transform_8, window_bounds = array<i64: 1, 128>}, {transform_indices = @transform_9, window_bounds = array<i64: 1, 1, 128>}]} {
    %c0 = arith.constant 0 : index
    %c0_0 = arith.constant 0 : index
    %c0_1 = arith.constant 0 : index
    %0 = vector.load %arg1[%c0, %c0_0, %c0_1] : memref<1x128x128xbf16, #tpu.memory_space<vmem>>, vector<1x128x128xbf16>
    %1 = vector.shape_cast %0 : vector<1x128x128xbf16> to vector<128x128xbf16>
    %c0_2 = arith.constant 0 : index
    %c0_3 = arith.constant 0 : index
    %c0_4 = arith.constant 0 : index
    %2 = vector.load %arg2[%c0_2, %c0_3, %c0_4] : memref<1x128x128xbf16, #tpu.memory_space<vmem>>, vector<1x128x128xbf16>
    %3 = vector.shape_cast %2 : vector<1x128x128xbf16> to vector<128x128xbf16>
    %c0_5 = arith.constant 0 : index
    %c0_6 = arith.constant 0 : index
    %4 = vector.load %arg4[%c0_5, %c0_6] : memref<128x128xbf16, #tpu.memory_space<vmem>>, vector<128x128xbf16>
    %cst = arith.constant dense<0.000000e+00> : vector<128x128xf32>
    %5 = tpu.matmul %3, %4, %cst {dimension_numbers = #tpu.dot_dimension_numbers<[1], [0], [0], [1], [0, 0, 1, 1], [], []>} : vector<128x128xbf16>, vector<128x128xbf16>, vector<128x128xf32> -> vector<128x128xf32>
    %6 = arith.truncf %5 : vector<128x128xf32> to vector<128x128xbf16>
    %cst_7 = arith.constant dense<0.000000e+00> : vector<128x128xf32>
    %7 = tpu.matmul %1, %6, %cst_7 {dimension_numbers = #tpu.dot_dimension_numbers<[1], [0], [0], [1], [0, 0, 1, 1], [], []>} : vector<128x128xbf16>, vector<128x128xbf16>, vector<128x128xf32> -> vector<128x128xf32>
    %c0_8 = arith.constant 0 : index
    %c0_9 = arith.constant 0 : index
    %8 = vector.load %arg5[%c0_8, %c0_9] : memref<1x128xf32, #tpu.memory_space<vmem>>, vector<1x128xf32>
    %9 = vector.broadcast %8 : vector<1x128xf32> to vector<128x128xf32>
    %10 = arith.addf %7, %9 : vector<128x128xf32>
    %cst_10 = arith.constant 0.000000e+00 : f32
    %11 = vector.broadcast %cst_10 : f32 to vector<128x128xf32>
    %12 = arith.maximumf %10, %11 : vector<128x128xf32>
    %13 = arith.truncf %12 : vector<128x128xf32> to vector<128x128xbf16>
    %cst_11 = arith.constant dense<0.000000e+00> : vector<128x128xf32>
    %14 = tpu.matmul %1, %13, %cst_11 {dimension_numbers = #tpu.dot_dimension_numbers<[1], [0], [0], [1], [0, 0, 1, 1], [], []>} : vector<128x128xbf16>, vector<128x128xbf16>, vector<128x128xf32> -> vector<128x128xf32>
    %15 = arith.truncf %14 : vector<128x128xf32> to vector<128x128xbf16>
    %c0_12 = arith.constant 0 : index
    %c0_13 = arith.constant 0 : index
    %16 = vector.load %arg6[%c0_12, %c0_13] : memref<128x128xbf16, #tpu.memory_space<vmem>>, vector<128x128xbf16>
    %cst_14 = arith.constant dense<0.000000e+00> : vector<128x128xf32>
    %17 = tpu.matmul %15, %16, %cst_14 {dimension_numbers = #tpu.dot_dimension_numbers<[1], [0], [0], [1], [0, 0, 1, 1], [], []>} : vector<128x128xbf16>, vector<128x128xbf16>, vector<128x128xf32> -> vector<128x128xf32>
    %c0_15 = arith.constant 0 : index
    %c0_16 = arith.constant 0 : index
    %18 = vector.load %arg7[%c0_15, %c0_16] : memref<1x128xf32, #tpu.memory_space<vmem>>, vector<1x128xf32>
    %19 = vector.broadcast %18 : vector<1x128xf32> to vector<128x128xf32>
    %20 = arith.addf %17, %19 : vector<128x128xf32>
    %cst_17 = arith.constant 0.000000e+00 : f32
    %21 = vector.broadcast %cst_17 : f32 to vector<128x128xf32>
    %22 = arith.maximumf %20, %21 : vector<128x128xf32>
    %c0_18 = arith.constant 0 : index
    %c0_19 = arith.constant 0 : index
    %23 = vector.load %arg3[%c0_18, %c0_19] : memref<1x128xbf16, #tpu.memory_space<vmem>>, vector<1x128xbf16>
    %24 = arith.truncf %22 : vector<128x128xf32> to vector<128x128xbf16>
    %cst_20 = arith.constant dense<0.000000e+00> : vector<1x128xf32>
    %25 = tpu.matmul %23, %24, %cst_20 {dimension_numbers = #tpu.dot_dimension_numbers<[1], [0], [0], [1], [0, 0, 1, 1], [], []>} : vector<1x128xbf16>, vector<128x128xbf16>, vector<1x128xf32> -> vector<1x128xf32>
    %26 = arith.truncf %25 : vector<1x128xf32> to vector<1x128xbf16>
    %c0_21 = arith.constant 0 : index
    %c0_22 = arith.constant 0 : index
    %27 = vector.load %arg8[%c0_21, %c0_22] : memref<128x128xbf16, #tpu.memory_space<vmem>>, vector<128x128xbf16>
    %cst_23 = arith.constant dense<0.000000e+00> : vector<1x128xf32>
    %28 = tpu.matmul %26, %27, %cst_23 {dimension_numbers = #tpu.dot_dimension_numbers<[1], [0], [0], [1], [0, 0, 1, 1], [], []>} : vector<1x128xbf16>, vector<128x128xbf16>, vector<1x128xf32> -> vector<1x128xf32>
    %c0_24 = arith.constant 0 : index
    %c0_25 = arith.constant 0 : index
    %29 = vector.load %arg9[%c0_24, %c0_25] : memref<1x128xf32, #tpu.memory_space<vmem>>, vector<1x128xf32>
    %30 = arith.addf %28, %29 : vector<1x128xf32>
    %cst_26 = arith.constant dense<0xFF800000> : vector<1xf32>
    %31 = vector.multi_reduction <maximumf>, %30, %cst_26 [1] : vector<1x128xf32> to vector<1xf32>
    %32 = vector.shape_cast %31 : vector<1xf32> to vector<1x1xf32>
    %33 = vector.broadcast %32 : vector<1x1xf32> to vector<1x128xf32>
    %34 = arith.subf %30, %33 : vector<1x128xf32>
    %35 = math.exp %34 : vector<1x128xf32>
    %cst_27 = arith.constant dense<0.000000e+00> : vector<1xf32>
    %36 = vector.multi_reduction <add>, %35, %cst_27 [1] : vector<1x128xf32> to vector<1xf32>
    %37 = vector.shape_cast %36 : vector<1xf32> to vector<1x1xf32>
    %38 = math.log %37 : vector<1x1xf32>
    %39 = arith.addf %38, %32 : vector<1x1xf32>
    %40 = vector.broadcast %39 : vector<1x1xf32> to vector<1x128xf32>
    %41 = arith.subf %30, %40 : vector<1x128xf32>
    %42 = vector.shape_cast %41 : vector<1x128xf32> to vector<1x1x128xf32>
    %c0_28 = arith.constant 0 : index
    %c0_29 = arith.constant 0 : index
    %c0_30 = arith.constant 0 : index
    %43 = vector.load %arg10[%c0_28, %c0_29, %c0_30] : memref<1x1x128xf32, #tpu.memory_space<vmem>>, vector<1x1x128xf32>
    tpu.vector_store %arg10[%c0_28, %c0_29, %c0_30], %42 {strides = array<i32>} : memref<1x1x128xf32, #tpu.memory_space<vmem>>, vector<1x1x128xf32>,
    return
  }
  func.func @transform_0(%arg0: i32) -> (i32, i32, i32) {
    %c0_i32 = arith.constant 0 : i32
    %c0_i32_0 = arith.constant 0 : i32
    %c0_i32_1 = arith.constant 0 : i32
    return %arg0, %c0_i32, %c0_i32_0 : i32, i32, i32
  }
  func.func @transform_1(%arg0: i32) -> (i32, i32, i32) {
    %c0_i32 = arith.constant 0 : i32
    %c0_i32_0 = arith.constant 0 : i32
    %c0_i32_1 = arith.constant 0 : i32
    return %arg0, %c0_i32, %c0_i32_0 : i32, i32, i32
  }
  func.func @transform_2(%arg0: i32) -> (i32, i32) {
    %c0_i32 = arith.constant 0 : i32
    %c0_i32_0 = arith.constant 0 : i32
    %c0_i32_1 = arith.constant 0 : i32
    return %c0_i32, %c0_i32_0 : i32, i32
  }
  func.func @transform_3(%arg0: i32) -> (i32, i32) {
    %c0_i32 = arith.constant 0 : i32
    %c0_i32_0 = arith.constant 0 : i32
    %c0_i32_1 = arith.constant 0 : i32
    return %c0_i32, %c0_i32_0 : i32, i32
  }
  func.func @transform_4(%arg0: i32) -> (i32, i32) {
    %c0_i32 = arith.constant 0 : i32
    %c0_i32_0 = arith.constant 0 : i32
    %c0_i32_1 = arith.constant 0 : i32
    return %c0_i32, %c0_i32_0 : i32, i32
  }
  func.func @transform_5(%arg0: i32) -> (i32, i32) {
    %c0_i32 = arith.constant 0 : i32
    %c0_i32_0 = arith.constant 0 : i32
    %c0_i32_1 = arith.constant 0 : i32
    return %c0_i32, %c0_i32_0 : i32, i32
  }
  func.func @transform_6(%arg0: i32) -> (i32, i32) {
    %c0_i32 = arith.constant 0 : i32
    %c0_i32_0 = arith.constant 0 : i32
    %c0_i32_1 = arith.constant 0 : i32
    return %c0_i32, %c0_i32_0 : i32, i32
  }
  func.func @transform_7(%arg0: i32) -> (i32, i32) {
    %c0_i32 = arith.constant 0 : i32
    %c0_i32_0 = arith.constant 0 : i32
    %c0_i32_1 = arith.constant 0 : i32
    return %c0_i32, %c0_i32_0 : i32, i32
  }
  func.func @transform_8(%arg0: i32) -> (i32, i32) {
    %c0_i32 = arith.constant 0 : i32
    %c0_i32_0 = arith.constant 0 : i32
    %c0_i32_1 = arith.constant 0 : i32
    return %c0_i32, %c0_i32_0 : i32, i32
  }
  func.func @transform_9(%arg0: i32) -> (i32, i32, i32) {
    %c0_i32 = arith.constant 0 : i32
    %c0_i32_0 = arith.constant 0 : i32
    %c0_i32_1 = arith.constant 0 : i32
    return %arg0, %c0_i32, %c0_i32_0 : i32, i32, i32
  }
}

</mosaic_0001>

<llo_original>
// kernel: brainnn_forward.1
$region0: #{brainnn_forward.1}
  #allocation0 [shape = 'u32[]', space=smem, size = 0x4, offset = 0x4, fixed_abs, tag = 'smem constant byte address 0x4 - core index']
  #allocation1 [shape = 'u32[144,128]{1,0:T(1,128)}', space=vmem, size = 0x12000, scoped, tag = 'internal scratch']
  %s0 = inlined_call_operand.vmem [shape: bf16[8,128,128], index: 0, kind: input, shape index: {}]
  %s1 = inlined_call_operand.vmem [shape: bf16[8,128,128], index: 1, kind: input, shape index: {}]
  %s2 = inlined_call_operand.vmem [shape: bf16[1,128], index: 2, kind: input, shape index: {}]
  %s3 = inlined_call_operand.vmem [shape: bf16[128,128], index: 3, kind: input, shape index: {}]
  %s4 = inlined_call_operand.vmem [shape: f32[1,128], index: 4, kind: input, shape index: {}]
  %s5 = inlined_call_operand.vmem [shape: bf16[128,128], index: 5, kind: input, shape index: {}]
  %s6 = inlined_call_operand.vmem [shape: f32[1,128], index: 6, kind: input, shape index: {}]
  %s7 = inlined_call_operand.vmem [shape: bf16[128,128], index: 7, kind: input, shape index: {}]
  %s8 = inlined_call_operand.vmem [shape: f32[1,128], index: 8, kind: input, shape index: {}]
  %s9 = inlined_call_operand.vmem [shape: f32[8,1,128], index: 9, kind: output, shape index: {}]
  %s10 = sld [smem:[#allocation0]]
  $region69: #{brainnn_forward.1} parent=0
    _
  %s12 = ssub.s32 1, %s10
  %s13 = scalar_select 0, %s12, %s10
  loop: start=0, step=1, limit=10
  $region2: #{brainnn_forward.1} parent=0 // loop_pre_header
    _
  $region3: #{brainnn_forward.1} parent=0 // loop_header
    %s15 = sphi 0, %s19
    %p16 = scmp.ge.s32.totalorder %s15, 10
    %s25 = sphi 0, %s27
    %s28 = sphi 0, %s25
    %s29 = sphi 0, %s28
    %s45 = sphi 0, %s29
    %s51 = sphi 0, %s53
    %s54 = sphi 0, %s51
    %s55 = sphi 0, %s54
    %s71 = sphi 0, %s55
    %s75 = sphi 0, %s75
    %s77 = sphi 0, %s75
    %s78 = sphi 0, %s77
    %s92 = sphi 0, %s78
    %s96 = sphi 0, %s96
    %s98 = sphi 0, %s96
    %s99 = sphi 0, %s98
    %s113 = sphi 0, %s99
    %s117 = sphi 0, %s117
    %s119 = sphi 0, %s117
    %s120 = sphi 0, %s119
    %s134 = sphi 0, %s120
    %s138 = sphi 0, %s138
    %s140 = sphi 0, %s138
    %s141 = sphi 0, %s140
    %s155 = sphi 0, %s141
    %s159 = sphi 0, %s159
    %s161 = sphi 0, %s159
    %s162 = sphi 0, %s161
    %s176 = sphi 0, %s162
    %s180 = sphi 0, %s180
    %s182 = sphi 0, %s180
    %s183 = sphi 0, %s182
    %s197 = sphi 0, %s183
    %s201 = sphi 0, %s201
    %s203 = sphi 0, %s201
    %s204 = sphi 0, %s203
    %s218 = sphi 0, %s204
    %s224 = sphi 0, %s226
    %s227 = sphi 0, %s224
    %s228 = sphi 0, %s227
    %s244 = sphi 0, %s228
  $region4: #{brainnn_forward.1} parent=0 // loop_header_branch
    %18 = sbr.rel (%p16) target = $region8
  $region5: #{brainnn_forward.1} parent=0 // loop_body
    %s20 = ssub.s32 %s15, 1
    %s21 = ssub.s32 %s15, 2
    %s22 = sadd.s32 %s15, 1
    %s23 = ssub.s32 %s15, %s22
    %p24 = scmp.eq.s32.totalorder %s23, 0
    %s26 = sadd.s32 %s25, 1
    %s27 = scalar_select %p24, %s25, %s26
    %p30 = pneg %p24
    %p31 = scmp.eq.s32.totalorder %s15, 7
    %p32 = por %p30, %p31
    %p33 = scmp.ne.s32.totalorder %s25, %s28
    %p34 = scmp.eq.s32.totalorder %s15, 0
    %p35 = por %p33, %p34
    %p36 = scmp.ne.s32.totalorder %s25, %s28
    %p37 = scmp.eq.s32.totalorder %s20, 7
    %p38 = por %p36, %p37
    %p39 = scmp.ne.s32.totalorder %s28, %s29
    %p40 = scmp.eq.s32.totalorder %s20, 0
    %p41 = por %p39, %p40
    %p42 = scmp.ne.s32.totalorder %s28, %s29
    %p43 = scmp.eq.s32.totalorder %s21, 7
    %p44 = por %p42, %p43
    %p46 = scmp.ne.s32.totalorder %s29, %s45
    %p47 = scmp.eq.s32.totalorder %s21, 0
    %p48 = por %p46, %p47
    %s49 = ssub.s32 %s15, %s22
    %p50 = scmp.eq.s32.totalorder %s49, 0
    %s52 = sadd.s32 %s51, 1
    %s53 = scalar_select %p50, %s51, %s52
    %p56 = pneg %p50
    %p57 = scmp.eq.s32.totalorder %s15, 7
    %p58 = por %p56, %p57
    %p59 = scmp.ne.s32.totalorder %s51, %s54
    %p60 = scmp.eq.s32.totalorder %s15, 0
    %p61 = por %p59, %p60
    %p62 = scmp.ne.s32.totalorder %s51, %s54
    %p63 = scmp.eq.s32.totalorder %s20, 7
    %p64 = por %p62, %p63
    %p65 = scmp.ne.s32.totalorder %s54, %s55
    %p66 = scmp.eq.s32.totalorder %s20, 0
    %p67 = por %p65, %p66
    %p68 = scmp.ne.s32.totalorder %s54, %s55
    %p69 = scmp.eq.s32.totalorder %s21, 7
    %p70 = por %p68, %p69
    %p72 = scmp.ne.s32.totalorder %s55, %s71
    %p73 = scmp.eq.s32.totalorder %s21, 0
    %p74 = por %p72, %p73
    %s76 = sadd.s32 %s75, 1
    %p79 = scmp.eq.s32.totalorder %s15, 7
    %p80 = scmp.ne.s32.totalorder %s75, %s77
    %p81 = scmp.eq.s32.totalorder %s15, 0
    %p82 = por %p80, %p81
    %p83 = scmp.ne.s32.totalorder %s75, %s77
    %p84 = scmp.eq.s32.totalorder %s20, 7
    %p85 = por %p83, %p84
    %p86 = scmp.ne.s32.totalorder %s77, %s78
    %p87 = scmp.eq.s32.totalorder %s20, 0
    %p88 = por %p86, %p87
    %p89 = scmp.ne.s32.totalorder %s77, %s78
    %p90 = scmp.eq.s32.totalorder %s21, 7
    %p91 = por %p89, %p90
    %p93 = scmp.ne.s32.totalorder %s78, %s92
    %p94 = scmp.eq.s32.totalorder %s21, 0
    %p95 = por %p93, %p94
    %s97 = sadd.s32 %s96, 1
    %p100 = scmp.eq.s32.totalorder %s15, 7
    %p101 = scmp.ne.s32.totalorder %s96, %s98
    %p102 = scmp.eq.s32.totalorder %s15, 0
    %p103 = por %p101, %p102
    %p104 = scmp.ne.s32.totalorder %s96, %s98
    %p105 = scmp.eq.s32.totalorder %s20, 7
    %p106 = por %p104, %p105
    %p107 = scmp.ne.s32.totalorder %s98, %s99
    %p108 = scmp.eq.s32.totalorder %s20, 0
    %p109 = por %p107, %p108
    %p110 = scmp.ne.s32.totalorder %s98, %s99
    %p111 = scmp.eq.s32.totalorder %s21, 7
    %p112 = por %p110, %p111
    %p114 = scmp.ne.s32.totalorder %s99, %s113
    %p115 = scmp.eq.s32.totalorder %s21, 0
    %p116 = por %p114, %p115
    %s118 = sadd.s32 %s117, 1
    %p121 = scmp.eq.s32.totalorder %s15, 7
    %p122 = scmp.ne.s32.totalorder %s117, %s119
    %p123 = scmp.eq.s32.totalorder %s15, 0
    %p124 = por %p122, %p123
    %p125 = scmp.ne.s32.totalorder %s117, %s119
    %p126 = scmp.eq.s32.totalorder %s20, 7
    %p127 = por %p125, %p126
    %p128 = scmp.ne.s32.totalorder %s119, %s120
    %p129 = scmp.eq.s32.totalorder %s20, 0
    %p130 = por %p128, %p129
    %p131 = scmp.ne.s32.totalorder %s119, %s120
    %p132 = scmp.eq.s32.totalorder %s21, 7
    %p133 = por %p131, %p132
    %p135 = scmp.ne.s32.totalorder %s120, %s134
    %p136 = scmp.eq.s32.totalorder %s21, 0
    %p137 = por %p135, %p136
    %s139 = sadd.s32 %s138, 1
    %p142 = scmp.eq.s32.totalorder %s15, 7
    %p143 = scmp.ne.s32.totalorder %s138, %s140
    %p144 = scmp.eq.s32.totalorder %s15, 0
    %p145 = por %p143, %p144
    %p146 = scmp.ne.s32.totalorder %s138, %s140
    %p147 = scmp.eq.s32.totalorder %s20, 7
    %p148 = por %p146, %p147
    %p149 = scmp.ne.s32.totalorder %s140, %s141
    %p150 = scmp.eq.s32.totalorder %s20, 0
    %p151 = por %p149, %p150
    %p152 = scmp.ne.s32.totalorder %s140, %s141
    %p153 = scmp.eq.s32.totalorder %s21, 7
    %p154 = por %p152, %p153
    %p156 = scmp.ne.s32.totalorder %s141, %s155
    %p157 = scmp.eq.s32.totalorder %s21, 0
    %p158 = por %p156, %p157
    %s160 = sadd.s32 %s159, 1
    %p163 = scmp.eq.s32.totalorder %s15, 7
    %p164 = scmp.ne.s32.totalorder %s159, %s161
    %p165 = scmp.eq.s32.totalorder %s15, 0
    %p166 = por %p164, %p165
    %p167 = scmp.ne.s32.totalorder %s159, %s161
    %p168 = scmp.eq.s32.totalorder %s20, 7
    %p169 = por %p167, %p168
    %p170 = scmp.ne.s32.totalorder %s161, %s162
    %p171 = scmp.eq.s32.totalorder %s20, 0
    %p172 = por %p170, %p171
    %p173 = scmp.ne.s32.totalorder %s161, %s162
    %p174 = scmp.eq.s32.totalorder %s21, 7
    %p175 = por %p173, %p174
    %p177 = scmp.ne.s32.totalorder %s162, %s176
    %p178 = scmp.eq.s32.totalorder %s21, 0
    %p179 = por %p177, %p178
    %s181 = sadd.s32 %s180, 1
    %p184 = scmp.eq.s32.totalorder %s15, 7
    %p185 = scmp.ne.s32.totalorder %s180, %s182
    %p186 = scmp.eq.s32.totalorder %s15, 0
    %p187 = por %p185, %p186
    %p188 = scmp.ne.s32.totalorder %s180, %s182
    %p189 = scmp.eq.s32.totalorder %s20, 7
    %p190 = por %p188, %p189
    %p191 = scmp.ne.s32.totalorder %s182, %s183
    %p192 = scmp.eq.s32.totalorder %s20, 0
    %p193 = por %p191, %p192
    %p194 = scmp.ne.s32.totalorder %s182, %s183
    %p195 = scmp.eq.s32.totalorder %s21, 7
    %p196 = por %p194, %p195
    %p198 = scmp.ne.s32.totalorder %s183, %s197
    %p199 = scmp.eq.s32.totalorder %s21, 0
    %p200 = por %p198, %p199
    %s202 = sadd.s32 %s201, 1
    %p205 = scmp.eq.s32.totalorder %s15, 7
    %p206 = scmp.ne.s32.totalorder %s201, %s203
    %p207 = scmp.eq.s32.totalorder %s15, 0
    %p208 = por %p206, %p207
    %p209 = scmp.ne.s32.totalorder %s201, %s203
    %p210 = scmp.eq.s32.totalorder %s20, 7
    %p211 = por %p209, %p210
    %p212 = scmp.ne.s32.totalorder %s203, %s204
    %p213 = scmp.eq.s32.totalorder %s20, 0
    %p214 = por %p212, %p213
    %p215 = scmp.ne.s32.totalorder %s203, %s204
    %p216 = scmp.eq.s32.totalorder %s21, 7
    %p217 = por %p215, %p216
    %p219 = scmp.ne.s32.totalorder %s204, %s218
    %p220 = scmp.eq.s32.totalorder %s21, 0
    %p221 = por %p219, %p220
    %s222 = ssub.s32 %s15, %s22
    %p223 = scmp.eq.s32.totalorder %s222, 0
    %s225 = sadd.s32 %s224, 1
    %s226 = scalar_select %p223, %s224, %s225
    %p229 = pneg %p223
    %p230 = scmp.eq.s32.totalorder %s15, 7
    %p231 = por %p229, %p230
    %p232 = scmp.ne.s32.totalorder %s224, %s227
    %p233 = scmp.eq.s32.totalorder %s15, 0
    %p234 = por %p232, %p233
    %p235 = scmp.ne.s32.totalorder %s224, %s227
    %p236 = scmp.eq.s32.totalorder %s20, 7
    %p237 = por %p235, %p236
    %p238 = scmp.ne.s32.totalorder %s227, %s228
    %p239 = scmp.eq.s32.totalorder %s20, 0
    %p240 = por %p238, %p239
    %p241 = scmp.ne.s32.totalorder %s227, %s228
    %p242 = scmp.eq.s32.totalorder %s21, 7
    %p243 = por %p241, %p242
    %p245 = scmp.ne.s32.totalorder %s228, %s244
    %p246 = scmp.eq.s32.totalorder %s21, 0
    %p247 = por %p245, %p246
    %p248 = scmp.le.s32.totalorder 1, %s15
    %p249 = scmp.lt.s32.totalorder %s15, 9
    %p250 = pnand %p248, %p249
    %p251 = pneg %p250
    // Predicated region
    $region9: #{brainnn_forward.1} parent=5 // pred_check
      _
    $region10: #{brainnn_forward.1} parent=5 // pred_check_branch
      %253 = sbr.rel (%p250) target = $region12
    $region11: #{brainnn_forward.1} parent=5 // pred_region
      %s254 = ssub.s32 %s15, 1
      // Predicated region
      $region13: #{brainnn_forward.1} parent=11 // pred_check
        %p255 = pneg %p88
      $region14: #{brainnn_forward.1} parent=11 // pred_check_branch
        %257 = sbr.rel (%p255) target = $region16
      $region15: #{brainnn_forward.1} parent=11 // pred_region
        _
      $region16: #{brainnn_forward.1} parent=11 // pred_fallthru
        _
      // Predicated region
      $region17: #{brainnn_forward.1} parent=11 // pred_check
        %p258 = pneg %p109
      $region18: #{brainnn_forward.1} parent=11 // pred_check_branch
        %260 = sbr.rel (%p258) target = $region20
      $region19: #{brainnn_forward.1} parent=11 // pred_region
        _
      $region20: #{brainnn_forward.1} parent=11 // pred_fallthru
        _
      // Predicated region
      $region21: #{brainnn_forward.1} parent=11 // pred_check
        %p261 = pneg %p130
      $region22: #{brainnn_forward.1} parent=11 // pred_check_branch
        %263 = sbr.rel (%p261) target = $region24
      $region23: #{brainnn_forward.1} parent=11 // pred_region
        _
      $region24: #{brainnn_forward.1} parent=11 // pred_fallthru
        _
      // Predicated region
      $region25: #{brainnn_forward.1} parent=11 // pred_check
        %p264 = pneg %p151
      $region26: #{brainnn_forward.1} parent=11 // pred_check_branch
        %266 = sbr.rel (%p264) target = $region28
      $region27: #{brainnn_forward.1} parent=11 // pred_region
        _
      $region28: #{brainnn_forward.1} parent=11 // pred_fallthru
        _
      // Predicated region
      $region29: #{brainnn_forward.1} parent=11 // pred_check
        %p267 = pneg %p172
      $region30: #{brainnn_forward.1} parent=11 // pred_check_branch
        %269 = sbr.rel (%p267) target = $region32
      $region31: #{brainnn_forward.1} parent=11 // pred_region
        _
      $region32: #{brainnn_forward.1} parent=11 // pred_fallthru
        _
      // Predicated region
      $region33: #{brainnn_forward.1} parent=11 // pred_check
        %p270 = pneg %p193
      $region34: #{brainnn_forward.1} parent=11 // pred_check_branch
        %272 = sbr.rel (%p270) target = $region36
      $region35: #{brainnn_forward.1} parent=11 // pred_region
        _
      $region36: #{brainnn_forward.1} parent=11 // pred_fallthru
        _
      // Predicated region
      $region37: #{brainnn_forward.1} parent=11 // pred_check
        %p273 = pneg %p214
      $region38: #{brainnn_forward.1} parent=11 // pred_check_branch
        %275 = sbr.rel (%p273) target = $region40
      $region39: #{brainnn_forward.1} parent=11 // pred_region
        _
      $region40: #{brainnn_forward.1} parent=11 // pred_fallthru
        _
    $region12: #{brainnn_forward.1} parent=5 // pred_fallthru
      _
    %p276 = scmp.lt.s32.totalorder %s15, 8
    // Predicated region
    $region41: #{brainnn_forward.1} parent=5 // pred_check
      %p277 = pneg %p276
    $region42: #{brainnn_forward.1} parent=5 // pred_check_branch
      %279 = sbr.rel (%p277) target = $region44
    $region43: #{brainnn_forward.1} parent=5 // pred_region
      // Predicated region
      $region45: #{brainnn_forward.1} parent=43 // pred_check
        %p280 = pneg %p35
      $region46: #{brainnn_forward.1} parent=43 // pred_check_branch
        %282 = sbr.rel (%p280) target = $region48
      $region47: #{brainnn_forward.1} parent=43 // pred_region
        %p283 = scmp.lt.s32.totalorder %s15, 7
        %s284 = scalar_select %p283, %s15, 7
        %s285 = smul.addr %s284, 16
        %s286 = smul.addr %s285, 4
        %s287 = scalar_lea.vmem %s0, %s286
      $region48: #{brainnn_forward.1} parent=43 // pred_fallthru
        _
      // Predicated region
      $region49: #{brainnn_forward.1} parent=43 // pred_check
        %p288 = pneg %p61
      $region50: #{brainnn_forward.1} parent=43 // pred_check_branch
        %290 = sbr.rel (%p288) target = $region52
      $region51: #{brainnn_forward.1} parent=43 // pred_region
        %p291 = scmp.lt.s32.totalorder %s15, 7
        %s292 = scalar_select %p291, %s15, 7
        %s293 = smul.addr %s292, 16
        %s294 = smul.addr %s293, 4
        %s295 = scalar_lea.vmem %s1, %s294
      $region52: #{brainnn_forward.1} parent=43 // pred_fallthru
        _
    $region44: #{brainnn_forward.1} parent=5 // pred_fallthru
      _
    %p296 = scmp.le.s32.totalorder 1, %s15
    %p297 = scmp.lt.s32.totalorder %s15, 9
    %p298 = pnand %p296, %p297
    %p299 = pneg %p298
    // Predicated region
    $region53: #{brainnn_forward.1} parent=5 // pred_check
      _
    $region54: #{brainnn_forward.1} parent=5 // pred_check_branch
      %301 = sbr.rel (%p298) target = $region56
    $region55: #{brainnn_forward.1} parent=5 // pred_region
      %s302 = ssub.s32 %s15, 1
      %p303 = scmp.lt.s32.totalorder %s20, 7
      %s304 = scalar_select %p303, %s20, 7
      %s305 = smul.addr %s304, 16
      %s306 = smul.addr %s305, 4
      %s307 = scalar_lea.vmem %s0, %s306
      %p308 = pneg %p41
      %p309 = pneg %p38
      %p310 = scmp.lt.s32.totalorder %s20, 7
      %s311 = scalar_select %p310, %s20, 7
      %s312 = smul.addr %s311, 16
      %s313 = smul.addr %s312, 4
      %s314 = scalar_lea.vmem %s1, %s313
      %p315 = pneg %p67
      %p316 = pneg %p64
      %p317 = pneg %p88
      %p318 = pneg %p85
      %p319 = pneg %p109
      %p320 = pneg %p106
      %p321 = pneg %p130
      %p322 = pneg %p127
      %p323 = pneg %p151
      %p324 = pneg %p148
      %p325 = pneg %p172
      %p326 = pneg %p169
      %p327 = pneg %p193
      %p328 = pneg %p190
      %p329 = pneg %p214
      %p330 = pneg %p211
      %p331 = pneg %p240
      %p332 = pneg %p237
      %p333 = scmp.lt.s32.totalorder %s20, 7
      %s334 = scalar_select %p333, %s20, 7
      %s335 = scalar_lea.vmem %s9, %s334
      %p336 = scmp.lt.s32.totalorder %s20, 7
      %s337 = scalar_select %p336, %s20, 7
      %s338 = smul.addr %s337, 16
      %s339 = smul.addr %s338, 4
      %s340 = scalar_lea.vmem %s0, %s339
      %p341 = scmp.lt.s32.totalorder %s20, 7
      %s342 = scalar_select %p341, %s20, 7
      %s343 = smul.addr %s342, 16
      %s344 = smul.addr %s343, 4
      %s345 = scalar_lea.vmem %s1, %s344
      %p346 = scmp.lt.s32.totalorder %s20, 7
      %s347 = scalar_select %p346, %s20, 7
      %s348 = scalar_lea.vmem %s9, %s347
      %v350 = vld [vmem:[%s340] sm:$0xf]
      %v351 = vld [vmem:[%s340 + $0x4] sm:$0xf]
      %v352 = vld [vmem:[%s340 + $0x8] sm:$0xf]
      %v353 = vld [vmem:[%s340 + $0xc] sm:$0xf]
      %v354 = vld [vmem:[%s340 + $0x10] sm:$0xf]
      %v355 = vld [vmem:[%s340 + $0x14] sm:$0xf]
      %v356 = vld [vmem:[%s340 + $0x18] sm:$0xf]
      %v357 = vld [vmem:[%s340 + $0x1c] sm:$0xf]
      %v358 = vld [vmem:[%s340 + $0x20] sm:$0xf]
      %v359 = vld [vmem:[%s340 + $0x24] sm:$0xf]
      %v360 = vld [vmem:[%s340 + $0x28] sm:$0xf]
      %v361 = vld [vmem:[%s340 + $0x2c] sm:$0xf]
      %v362 = vld [vmem:[%s340 + $0x30] sm:$0xf]
      %v363 = vld [vmem:[%s340 + $0x34] sm:$0xf]
      %v364 = vld [vmem:[%s340 + $0x38] sm:$0xf]
      %v365 = vld [vmem:[%s340 + $0x3c] sm:$0xf]
      %v366 = vld [vmem:[%s345] sm:$0xf]
      %v367 = vld [vmem:[%s345 + $0x4] sm:$0xf]
      %v368 = vld [vmem:[%s345 + $0x8] sm:$0xf]
      %v369 = vld [vmem:[%s345 + $0xc] sm:$0xf]
      %v370 = vld [vmem:[%s345 + $0x10] sm:$0xf]
      %v371 = vld [vmem:[%s345 + $0x14] sm:$0xf]
      %v372 = vld [vmem:[%s345 + $0x18] sm:$0xf]
      %v373 = vld [vmem:[%s345 + $0x1c] sm:$0xf]
      %v374 = vld [vmem:[%s345 + $0x20] sm:$0xf]
      %v375 = vld [vmem:[%s345 + $0x24] sm:$0xf]
      %v376 = vld [vmem:[%s345 + $0x28] sm:$0xf]
      %v377 = vld [vmem:[%s345 + $0x2c] sm:$0xf]
      %v378 = vld [vmem:[%s345 + $0x30] sm:$0xf]
      %v379 = vld [vmem:[%s345 + $0x34] sm:$0xf]
      %v380 = vld [vmem:[%s345 + $0x38] sm:$0xf]
      %v381 = vld [vmem:[%s345 + $0x3c] sm:$0xf]
      %v382 = vld [vmem:[%s3] sm:$0xf]
      %v383 = vld [vmem:[%s3 + $0x4] sm:$0xf]
      %v384 = vld [vmem:[%s3 + $0x8] sm:$0xf]
      %v385 = vld [vmem:[%s3 + $0xc] sm:$0xf]
      %v386 = vld [vmem:[%s3 + $0x10] sm:$0xf]
      %v387 = vld [vmem:[%s3 + $0x14] sm:$0xf]
      %v388 = vld [vmem:[%s3 + $0x18] sm:$0xf]
      %v389 = vld [vmem:[%s3 + $0x1c] sm:$0xf]
      %v390 = vld [vmem:[%s3 + $0x20] sm:$0xf]
      %v391 = vld [vmem:[%s3 + $0x24] sm:$0xf]
      %v392 = vld [vmem:[%s3 + $0x28] sm:$0xf]
      %v393 = vld [vmem:[%s3 + $0x2c] sm:$0xf]
      %v394 = vld [vmem:[%s3 + $0x30] sm:$0xf]
      %v395 = vld [vmem:[%s3 + $0x34] sm:$0xf]
      %v396 = vld [vmem:[%s3 + $0x38] sm:$0xf]
      %v397 = vld [vmem:[%s3 + $0x3c] sm:$0xf]
      %v414 = vunpack.c.l.b16 %v366
      %v415 = vunpack.c.l.b16 %v367
      %v416 = vunpack.c.l.b16 %v368
      %v417 = vunpack.c.l.b16 %v369
      %v418 = vunpack.c.l.b16 %v370
      %v419 = vunpack.c.l.b16 %v371
      %v420 = vunpack.c.l.b16 %v372
      %v421 = vunpack.c.l.b16 %v373
      %v422 = vunpack.c.l.b16 %v374
      %v423 = vunpack.c.l.b16 %v375
      %v424 = vunpack.c.l.b16 %v376
      %v425 = vunpack.c.l.b16 %v377
      %v426 = vunpack.c.l.b16 %v378
      %v427 = vunpack.c.l.b16 %v379
      %v428 = vunpack.c.l.b16 %v380
      %v429 = vunpack.c.l.b16 %v381
      %v430 = vpack.c.b16 %v415, %v414
      %v431 = vpack.c.b16 %v417, %v416
      %v432 = vpack.c.b16 %v419, %v418
      %v433 = vpack.c.b16 %v421, %v420
      %v434 = vpack.c.b16 %v423, %v422
      %v435 = vpack.c.b16 %v425, %v424
      %v436 = vpack.c.b16 %v427, %v426
      %v437 = vpack.c.b16 %v429, %v428
      %v462 = vunpack.c.l.b16 %v382
      %v463 = vunpack.c.l.b16 %v383
      %v464 = vunpack.c.l.b16 %v384
      %v465 = vunpack.c.l.b16 %v385
      %v466 = vunpack.c.l.b16 %v386
      %v467 = vunpack.c.l.b16 %v387
      %v468 = vunpack.c.l.b16 %v388
      %v469 = vunpack.c.l.b16 %v389
      %v470 = vunpack.c.l.b16 %v390
      %v471 = vunpack.c.l.b16 %v391
      %v472 = vunpack.c.l.b16 %v392
      %v473 = vunpack.c.l.b16 %v393
      %v474 = vunpack.c.l.b16 %v394
      %v475 = vunpack.c.l.b16 %v395
      %v476 = vunpack.c.l.b16 %v396
      %v477 = vunpack.c.l.b16 %v397
      %v478 = vpack.c.b16 %v463, %v462
      %v479 = vpack.c.b16 %v465, %v464
      %v480 = vpack.c.b16 %v467, %v466
      %v481 = vpack.c.b16 %v469, %v468
      %v482 = vpack.c.b16 %v471, %v470
      %v483 = vpack.c.b16 %v473, %v472
      %v484 = vpack.c.b16 %v475, %v474
      %v485 = vpack.c.b16 %v477, %v476
      %494 = vmatprep.subr.bf16.mxu0 0
      %495 = vmatpush1.bf16.msra.mxu0 %v485
      %496 = vmatprep.subr.bf16.mxu0 0
      %497 = vmatpush1.bf16.msra.mxu0 %v484
      %498 = vmatprep.subr.bf16.mxu0 0
      %499 = vmatpush1.bf16.msra.mxu0 %v483
      %500 = vmatprep.subr.bf16.mxu0 0
      %501 = vmatpush1.bf16.msra.mxu0 %v482
      %502 = vmatprep.subr.bf16.mxu0 0
      %503 = vmatpush1.bf16.msra.mxu0 %v481
      %504 = vmatprep.subr.bf16.mxu0 0
      %505 = vmatpush1.bf16.msra.mxu0 %v480
      %506 = vmatprep.subr.bf16.mxu0 0
      %507 = vmatpush1.bf16.msra.mxu0 %v479
      %508 = vmatprep.subr.bf16.mxu0 0
      %509 = vmatpush1.bf16.msra.mxu0 %v478
      %510 = vmatprep.subr.bf16.mxu0 0
      %511 = vmatpush2.bf16.msra.mxu0 0
      %512 = vmatprep.subr.bf16.mxu0 0
      %513 = vmatpush2.bf16.msra.mxu0 0
      %514 = vmatprep.subr.bf16.mxu0 0
      %515 = vmatpush2.bf16.msra.mxu0 0
      %516 = vmatprep.subr.bf16.mxu0 0
      %517 = vmatpush2.bf16.msra.mxu0 0
      %518 = vmatprep.subr.bf16.mxu0 0
      %519 = vmatpush2.bf16.msra.mxu0 0
      %520 = vmatprep.subr.bf16.mxu0 0
      %521 = vmatpush2.bf16.msra.mxu0 0
      %522 = vmatprep.subr.bf16.mxu0 0
      %523 = vmatpush2.bf16.msra.mxu0 0
      %524 = vmatprep.subr.bf16.mxu0 0
      %525 = vmatpush2.bf16.msra.mxu0 0
      %526 = vmatprep.mubr.bf16.mxu0 0
      %527 = vmatmul.mubr.bf16.gmra.mxu0 %v430
      %v528 = vpop.f32.mrf.mxu0
      %v529 = vadd.f32 0.0, %v528
      %v530 = vpop.f32.mrf.mxu0
      %v531 = vpop.f32.mrf.mxu0
      %v532 = vadd.f32 0.0, %v531
      %v533 = vpop.f32.mrf.mxu0
      %534 = vmatprep.mubr.bf16.mxu0 0
      %535 = vmatmul.mubr.bf16.gmra.mxu0 %v431
      %v536 = vpop.f32.mrf.mxu0
      %v537 = vadd.f32 0.0, %v536
      %v538 = vpop.f32.mrf.mxu0
      %v539 = vpop.f32.mrf.mxu0
      %v540 = vadd.f32 0.0, %v539
      %v541 = vpop.f32.mrf.mxu0
      %542 = vmatprep.mubr.bf16.mxu0 0
      %543 = vmatmul.mubr.bf16.gmra.mxu0 %v432
      %v544 = vpop.f32.mrf.mxu0
      %v545 = vadd.f32 0.0, %v544
      %v546 = vpop.f32.mrf.mxu0
      %v547 = vpop.f32.mrf.mxu0
      %v548 = vadd.f32 0.0, %v547
      %v549 = vpop.f32.mrf.mxu0
      %550 = vmatprep.mubr.bf16.mxu0 0
      %551 = vmatmul.mubr.bf16.gmra.mxu0 %v433
      %v552 = vpop.f32.mrf.mxu0
      %v553 = vadd.f32 0.0, %v552
      %v554 = vpop.f32.mrf.mxu0
      %v555 = vpop.f32.mrf.mxu0
      %v556 = vadd.f32 0.0, %v555
      %v557 = vpop.f32.mrf.mxu0
      %558 = vmatprep.mubr.bf16.mxu0 0
      %559 = vmatmul.mubr.bf16.gmra.mxu0 %v434
      %v560 = vpop.f32.mrf.mxu0
      %v561 = vadd.f32 0.0, %v560
      %v562 = vpop.f32.mrf.mxu0
      %v563 = vpop.f32.mrf.mxu0
      %v564 = vadd.f32 0.0, %v563
      %v565 = vpop.f32.mrf.mxu0
      %566 = vmatprep.mubr.bf16.mxu0 0
      %567 = vmatmul.mubr.bf16.gmra.mxu0 %v435
      %v568 = vpop.f32.mrf.mxu0
      %v569 = vadd.f32 0.0, %v568
      %v570 = vpop.f32.mrf.mxu0
      %v571 = vpop.f32.mrf.mxu0
      %v572 = vadd.f32 0.0, %v571
      %v573 = vpop.f32.mrf.mxu0
      %574 = vmatprep.mubr.bf16.mxu0 0
      %575 = vmatmul.mubr.bf16.gmra.mxu0 %v436
      %v576 = vpop.f32.mrf.mxu0
      %v577 = vadd.f32 0.0, %v576
      %v578 = vpop.f32.mrf.mxu0
      %v579 = vpop.f32.mrf.mxu0
      %v580 = vadd.f32 0.0, %v579
      %v581 = vpop.f32.mrf.mxu0
      %582 = vmatprep.mubr.bf16.mxu0 0
      %583 = vmatmul.mubr.bf16.gmra.mxu0 %v437
      %v584 = vpop.f32.mrf.mxu0
      %v585 = vadd.f32 0.0, %v584
      %v586 = vpop.f32.mrf.mxu0
      %v587 = vpop.f32.mrf.mxu0
      %v588 = vadd.f32 0.0, %v587
      %v589 = vpop.f32.mrf.mxu0
      %590 = vdwg.mxu0
      %v591 = vpack.c.bf16 %v532, %v529
      %v592 = vpack.c.bf16 %v540, %v537
      %v593 = vpack.c.bf16 %v548, %v545
      %v594 = vpack.c.bf16 %v556, %v553
      %v595 = vpack.c.bf16 %v564, %v561
      %v596 = vpack.c.bf16 %v572, %v569
      %v597 = vpack.c.bf16 %v580, %v577
      %v598 = vpack.c.bf16 %v588, %v585
      %v599 = vld [vmem:[%s4] sm:$0x1]
      %v601 = vlaneseq
      %v602 = vshrl.u32 %v601, 7
      %v603 = vsub.s32 0, %v602
      %v604 = vrot.slane %v599, %v603
      %v622 = vunpack.c.l.b16 %v350
      %v623 = vunpack.c.l.b16 %v351
      %v624 = vunpack.c.l.b16 %v352
      %v625 = vunpack.c.l.b16 %v353
      %v626 = vunpack.c.l.b16 %v354
      %v627 = vunpack.c.l.b16 %v355
      %v628 = vunpack.c.l.b16 %v356
      %v629 = vunpack.c.l.b16 %v357
      %v630 = vunpack.c.l.b16 %v358
      %v631 = vunpack.c.l.b16 %v359
      %v632 = vunpack.c.l.b16 %v360
      %v633 = vunpack.c.l.b16 %v361
      %v634 = vunpack.c.l.b16 %v362
      %v635 = vunpack.c.l.b16 %v363
      %v636 = vunpack.c.l.b16 %v364
      %v637 = vunpack.c.l.b16 %v365
      %v638 = vpack.c.b16 %v623, %v622
      %v639 = vpack.c.b16 %v625, %v624
      %v640 = vpack.c.b16 %v627, %v626
      %v641 = vpack.c.b16 %v629, %v628
      %v642 = vpack.c.b16 %v631, %v630
      %v643 = vpack.c.b16 %v633, %v632
      %v644 = vpack.c.b16 %v635, %v634
      %v645 = vpack.c.b16 %v637, %v636
      %654 = vmatprep.subr.bf16.mxu0 0
      %655 = vmatpush1.bf16.msra.mxu0 %v598
      %656 = vmatprep.subr.bf16.mxu0 0
      %657 = vmatpush1.bf16.msra.mxu0 %v597
      %658 = vmatprep.subr.bf16.mxu0 0
      %659 = vmatpush1.bf16.msra.mxu0 %v596
      %660 = vmatprep.subr.bf16.mxu0 0
      %661 = vmatpush1.bf16.msra.mxu0 %v595
      %662 = vmatprep.subr.bf16.mxu0 0
      %663 = vmatpush1.bf16.msra.mxu0 %v594
      %664 = vmatprep.subr.bf16.mxu0 0
      %665 = vmatpush1.bf16.msra.mxu0 %v593
      %666 = vmatprep.subr.bf16.mxu0 0
      %667 = vmatpush1.bf16.msra.mxu0 %v592
      %668 = vmatprep.subr.bf16.mxu0 0
      %669 = vmatpush1.bf16.msra.mxu0 %v591
      %670 = vmatprep.subr.bf16.mxu0 0
      %671 = vmatpush2.bf16.msra.mxu0 0
      %672 = vmatprep.subr.bf16.mxu0 0
      %673 = vmatpush2.bf16.msra.mxu0 0
      %674 = vmatprep.subr.bf16.mxu0 0
      %675 = vmatpush2.bf16.msra.mxu0 0
      %676 = vmatprep.subr.bf16.mxu0 0
      %677 = vmatpush2.bf16.msra.mxu0 0
      %678 = vmatprep.subr.bf16.mxu0 0
      %679 = vmatpush2.bf16.msra.mxu0 0
      %680 = vmatprep.subr.bf16.mxu0 0
      %681 = vmatpush2.bf16.msra.mxu0 0
      %682 = vmatprep.subr.bf16.mxu0 0
      %683 = vmatpush2.bf16.msra.mxu0 0
      %684 = vmatprep.subr.bf16.mxu0 0
      %685 = vmatpush2.bf16.msra.mxu0 0
      %686 = vmatprep.mubr.bf16.mxu0 0
      %687 = vmatmul.mubr.bf16.gmra.mxu0 %v638
      %v688 = vpop.f32.mrf.mxu0
      %v689 = vadd.f32 %v604, %v688
      %v690 = vpop.f32.mrf.mxu0
      %v691 = vpop.f32.mrf.mxu0
      %v692 = vadd.f32 %v604, %v691
      %v693 = vpop.f32.mrf.mxu0
      %694 = vmatprep.mubr.bf16.mxu0 0
      %695 = vmatmul.mubr.bf16.gmra.mxu0 %v639
      %v696 = vpop.f32.mrf.mxu0
      %v697 = vadd.f32 %v604, %v696
      %v698 = vpop.f32.mrf.mxu0
      %v699 = vpop.f32.mrf.mxu0
      %v700 = vadd.f32 %v604, %v699
      %v701 = vpop.f32.mrf.mxu0
      %702 = vmatprep.mubr.bf16.mxu0 0
      %703 = vmatmul.mubr.bf16.gmra.mxu0 %v640
      %v704 = vpop.f32.mrf.mxu0
      %v705 = vadd.f32 %v604, %v704
      %v706 = vpop.f32.mrf.mxu0
      %v707 = vpop.f32.mrf.mxu0
      %v708 = vadd.f32 %v604, %v707
      %v709 = vpop.f32.mrf.mxu0
      %710 = vmatprep.mubr.bf16.mxu0 0
      %711 = vmatmul.mubr.bf16.gmra.mxu0 %v641
      %v712 = vpop.f32.mrf.mxu0
      %v713 = vadd.f32 %v604, %v712
      %v714 = vpop.f32.mrf.mxu0
      %v715 = vpop.f32.mrf.mxu0
      %v716 = vadd.f32 %v604, %v715
      %v717 = vpop.f32.mrf.mxu0
      %718 = vmatprep.mubr.bf16.mxu0 0
      %719 = vmatmul.mubr.bf16.gmra.mxu0 %v642
      %v720 = vpop.f32.mrf.mxu0
      %v721 = vadd.f32 %v604, %v720
      %v722 = vpop.f32.mrf.mxu0
      %v723 = vpop.f32.mrf.mxu0
      %v724 = vadd.f32 %v604, %v723
      %v725 = vpop.f32.mrf.mxu0
      %726 = vmatprep.mubr.bf16.mxu0 0
      %727 = vmatmul.mubr.bf16.gmra.mxu0 %v643
      %v728 = vpop.f32.mrf.mxu0
      %v729 = vadd.f32 %v604, %v728
      %v730 = vpop.f32.mrf.mxu0
      %v731 = vpop.f32.mrf.mxu0
      %v732 = vadd.f32 %v604, %v731
      %v733 = vpop.f32.mrf.mxu0
      %734 = vmatprep.mubr.bf16.mxu0 0
      %735 = vmatmul.mubr.bf16.gmra.mxu0 %v644
      %v736 = vpop.f32.mrf.mxu0
      %v737 = vadd.f32 %v604, %v736
      %v738 = vpop.f32.mrf.mxu0
      %v739 = vpop.f32.mrf.mxu0
      %v740 = vadd.f32 %v604, %v739
      %v741 = vpop.f32.mrf.mxu0
      %742 = vmatprep.mubr.bf16.mxu0 0
      %743 = vmatmul.mubr.bf16.gmra.mxu0 %v645
      %v744 = vpop.f32.mrf.mxu0
      %v745 = vadd.f32 %v604, %v744
      %v746 = vpop.f32.mrf.mxu0
      %v747 = vpop.f32.mrf.mxu0
      %v748 = vadd.f32 %v604, %v747
      %v749 = vpop.f32.mrf.mxu0
      %750 = vdwg.mxu0
      %v751 = vmax.f32 %v689, 0.0
      %v752 = vmax.f32 %v692, 0.0
      %v753 = vmax.f32 %v697, 0.0
      %v754 = vmax.f32 %v700, 0.0
      %v755 = vmax.f32 %v705, 0.0
      %v756 = vmax.f32 %v708, 0.0
      %v757 = vmax.f32 %v713, 0.0
      %v758 = vmax.f32 %v716, 0.0
      %v759 = vmax.f32 %v721, 0.0
      %v760 = vmax.f32 %v724, 0.0
      %v761 = vmax.f32 %v729, 0.0
      %v762 = vmax.f32 %v732, 0.0
      %v763 = vmax.f32 %v737, 0.0
      %v764 = vmax.f32 %v740, 0.0
      %v765 = vmax.f32 %v745, 0.0
      %v766 = vmax.f32 %v748, 0.0
      %v767 = vpack.c.bf16 %v752, %v751
      %v768 = vpack.c.bf16 %v754, %v753
      %v769 = vpack.c.bf16 %v756, %v755
      %v770 = vpack.c.bf16 %v758, %v757
      %v771 = vpack.c.bf16 %v760, %v759
      %v772 = vpack.c.bf16 %v762, %v761
      %v773 = vpack.c.bf16 %v764, %v763
      %v774 = vpack.c.bf16 %v766, %v765
      %775 = vmatprep.subr.bf16.mxu0 0
      %776 = vmatpush1.bf16.msra.mxu0 %v774
      %777 = vmatprep.subr.bf16.mxu0 0
      %778 = vmatpush1.bf16.msra.mxu0 %v773
      %779 = vmatprep.subr.bf16.mxu0 0
      %780 = vmatpush1.bf16.msra.mxu0 %v772
      %781 = vmatprep.subr.bf16.mxu0 0
      %782 = vmatpush1.bf16.msra.mxu0 %v771
      %783 = vmatprep.subr.bf16.mxu0 0
      %784 = vmatpush1.bf16.msra.mxu0 %v770
      %785 = vmatprep.subr.bf16.mxu0 0
      %786 = vmatpush1.bf16.msra.mxu0 %v769
      %787 = vmatprep.subr.bf16.mxu0 0
      %788 = vmatpush1.bf16.msra.mxu0 %v768
      %789 = vmatprep.subr.bf16.mxu0 0
      %790 = vmatpush1.bf16.msra.mxu0 %v767
      %791 = vmatprep.subr.bf16.mxu0 0
      %792 = vmatpush2.bf16.msra.mxu0 0
      %793 = vmatprep.subr.bf16.mxu0 0
      %794 = vmatpush2.bf16.msra.mxu0 0
      %795 = vmatprep.subr.bf16.mxu0 0
      %796 = vmatpush2.bf16.msra.mxu0 0
      %797 = vmatprep.subr.bf16.mxu0 0
      %798 = vmatpush2.bf16.msra.mxu0 0
      %799 = vmatprep.subr.bf16.mxu0 0
      %800 = vmatpush2.bf16.msra.mxu0 0
      %801 = vmatprep.subr.bf16.mxu0 0
      %802 = vmatpush2.bf16.msra.mxu0 0
      %803 = vmatprep.subr.bf16.mxu0 0
      %804 = vmatpush2.bf16.msra.mxu0 0
      %805 = vmatprep.subr.bf16.mxu0 0
      %806 = vmatpush2.bf16.msra.mxu0 0
      %807 = vmatprep.mubr.bf16.mxu0 0
      %808 = vmatmul.mubr.bf16.gmra.mxu0 %v638
      %v809 = vpop.f32.mrf.mxu0
      %v810 = vadd.f32 0.0, %v809
      %v811 = vpop.f32.mrf.mxu0
      %v812 = vpop.f32.mrf.mxu0
      %v813 = vadd.f32 0.0, %v812
      %v814 = vpop.f32.mrf.mxu0
      %815 = vmatprep.mubr.bf16.mxu0 0
      %816 = vmatmul.mubr.bf16.gmra.mxu0 %v639
      %v817 = vpop.f32.mrf.mxu0
      %v818 = vadd.f32 0.0, %v817
      %v819 = vpop.f32.mrf.mxu0
      %v820 = vpop.f32.mrf.mxu0
      %v821 = vadd.f32 0.0, %v820
      %v822 = vpop.f32.mrf.mxu0
      %823 = vmatprep.mubr.bf16.mxu0 0
      %824 = vmatmul.mubr.bf16.gmra.mxu0 %v640
      %v825 = vpop.f32.mrf.mxu0
      %v826 = vadd.f32 0.0, %v825
      %v827 = vpop.f32.mrf.mxu0
      %v828 = vpop.f32.mrf.mxu0
      %v829 = vadd.f32 0.0, %v828
      %v830 = vpop.f32.mrf.mxu0
      %831 = vmatprep.mubr.bf16.mxu0 0
      %832 = vmatmul.mubr.bf16.gmra.mxu0 %v641
      %v833 = vpop.f32.mrf.mxu0
      %v834 = vadd.f32 0.0, %v833
      %v835 = vpop.f32.mrf.mxu0
      %v836 = vpop.f32.mrf.mxu0
      %v837 = vadd.f32 0.0, %v836
      %v838 = vpop.f32.mrf.mxu0
      %839 = vmatprep.mubr.bf16.mxu0 0
      %840 = vmatmul.mubr.bf16.gmra.mxu0 %v642
      %v841 = vpop.f32.mrf.mxu0
      %v842 = vadd.f32 0.0, %v841
      %v843 = vpop.f32.mrf.mxu0
      %v844 = vpop.f32.mrf.mxu0
      %v845 = vadd.f32 0.0, %v844
      %v846 = vpop.f32.mrf.mxu0
      %847 = vmatprep.mubr.bf16.mxu0 0
      %848 = vmatmul.mubr.bf16.gmra.mxu0 %v643
      %v849 = vpop.f32.mrf.mxu0
      %v850 = vadd.f32 0.0, %v849
      %v851 = vpop.f32.mrf.mxu0
      %v852 = vpop.f32.mrf.mxu0
      %v853 = vadd.f32 0.0, %v852
      %v854 = vpop.f32.mrf.mxu0
      %855 = vmatprep.mubr.bf16.mxu0 0
      %856 = vmatmul.mubr.bf16.gmra.mxu0 %v644
      %v857 = vpop.f32.mrf.mxu0
      %v858 = vadd.f32 0.0, %v857
      %v859 = vpop.f32.mrf.mxu0
      %v860 = vpop.f32.mrf.mxu0
      %v861 = vadd.f32 0.0, %v860
      %v862 = vpop.f32.mrf.mxu0
      %863 = vmatprep.mubr.bf16.mxu0 0
      %864 = vmatmul.mubr.bf16.gmra.mxu0 %v645
      %v865 = vpop.f32.mrf.mxu0
      %v866 = vadd.f32 0.0, %v865
      %v867 = vpop.f32.mrf.mxu0
      %v868 = vpop.f32.mrf.mxu0
      %v869 = vadd.f32 0.0, %v868
      %v870 = vpop.f32.mrf.mxu0
      %871 = vdwg.mxu0
      %v872 = vpack.c.bf16 %v813, %v810
      %v873 = vpack.c.bf16 %v821, %v818
      %v874 = vpack.c.bf16 %v829, %v826
      %v875 = vpack.c.bf16 %v837, %v834
      %v876 = vpack.c.bf16 %v845, %v842
      %v877 = vpack.c.bf16 %v853, %v850
      %v878 = vpack.c.bf16 %v861, %v858
      %v879 = vpack.c.bf16 %v869, %v866
      %v880 = vld [vmem:[%s5] sm:$0xf]
      %v881 = vld [vmem:[%s5 + $0x4] sm:$0xf]
      %v882 = vld [vmem:[%s5 + $0x8] sm:$0xf]
      %v883 = vld [vmem:[%s5 + $0xc] sm:$0xf]
      %v884 = vld [vmem:[%s5 + $0x10] sm:$0xf]
      %v885 = vld [vmem:[%s5 + $0x14] sm:$0xf]
      %v886 = vld [vmem:[%s5 + $0x18] sm:$0xf]
      %v887 = vld [vmem:[%s5 + $0x1c] sm:$0xf]
      %v888 = vld [vmem:[%s5 + $0x20] sm:$0xf]
      %v889 = vld [vmem:[%s5 + $0x24] sm:$0xf]
      %v890 = vld [vmem:[%s5 + $0x28] sm:$0xf]
      %v891 = vld [vmem:[%s5 + $0x2c] sm:$0xf]
      %v892 = vld [vmem:[%s5 + $0x30] sm:$0xf]
      %v893 = vld [vmem:[%s5 + $0x34] sm:$0xf]
      %v894 = vld [vmem:[%s5 + $0x38] sm:$0xf]
      %v895 = vld [vmem:[%s5 + $0x3c] sm:$0xf]
      %v896 = vld [vmem:[%s6] sm:$0x1]
      %v898 = vlaneseq
      %v899 = vshrl.u32 %v898, 7
      %v900 = vsub.s32 0, %v899
      %v901 = vrot.slane %v896, %v900
      %v919 = vunpack.c.l.b16 %v880
      %v920 = vunpack.c.l.b16 %v881
      %v921 = vunpack.c.l.b16 %v882
      %v922 = vunpack.c.l.b16 %v883
      %v923 = vunpack.c.l.b16 %v884
      %v924 = vunpack.c.l.b16 %v885
      %v925 = vunpack.c.l.b16 %v886
      %v926 = vunpack.c.l.b16 %v887
      %v927 = vunpack.c.l.b16 %v888
      %v928 = vunpack.c.l.b16 %v889
      %v929 = vunpack.c.l.b16 %v890
      %v930 = vunpack.c.l.b16 %v891
      %v931 = vunpack.c.l.b16 %v892
      %v932 = vunpack.c.l.b16 %v893
      %v933 = vunpack.c.l.b16 %v894
      %v934 = vunpack.c.l.b16 %v895
      %v935 = vpack.c.b16 %v920, %v919
      %v936 = vpack.c.b16 %v922, %v921
      %v937 = vpack.c.b16 %v924, %v923
      %v938 = vpack.c.b16 %v926, %v925
      %v939 = vpack.c.b16 %v928, %v927
      %v940 = vpack.c.b16 %v930, %v929
      %v941 = vpack.c.b16 %v932, %v931
      %v942 = vpack.c.b16 %v934, %v933
      %951 = vmatprep.subr.bf16.mxu0 0
      %952 = vmatpush1.bf16.msra.mxu0 %v942
      %953 = vmatprep.subr.bf16.mxu0 0
      %954 = vmatpush1.bf16.msra.mxu0 %v941
      %955 = vmatprep.subr.bf16.mxu0 0
      %956 = vmatpush1.bf16.msra.mxu0 %v940
      %957 = vmatprep.subr.bf16.mxu0 0
      %958 = vmatpush1.bf16.msra.mxu0 %v939
      %959 = vmatprep.subr.bf16.mxu0 0
      %960 = vmatpush1.bf16.msra.mxu0 %v938
      %961 = vmatprep.subr.bf16.mxu0 0
      %962 = vmatpush1.bf16.msra.mxu0 %v937
      %963 = vmatprep.subr.bf16.mxu0 0
      %964 = vmatpush1.bf16.msra.mxu0 %v936
      %965 = vmatprep.subr.bf16.mxu0 0
      %966 = vmatpush1.bf16.msra.mxu0 %v935
      %967 = vmatprep.subr.bf16.mxu0 0
      %968 = vmatpush2.bf16.msra.mxu0 0
      %969 = vmatprep.subr.bf16.mxu0 0
      %970 = vmatpush2.bf16.msra.mxu0 0
      %971 = vmatprep.subr.bf16.mxu0 0
      %972 = vmatpush2.bf16.msra.mxu0 0
      %973 = vmatprep.subr.bf16.mxu0 0
      %974 = vmatpush2.bf16.msra.mxu0 0
      %975 = vmatprep.subr.bf16.mxu0 0
      %976 = vmatpush2.bf16.msra.mxu0 0
      %977 = vmatprep.subr.bf16.mxu0 0
      %978 = vmatpush2.bf16.msra.mxu0 0
      %979 = vmatprep.subr.bf16.mxu0 0
      %980 = vmatpush2.bf16.msra.mxu0 0
      %981 = vmatprep.subr.bf16.mxu0 0
      %982 = vmatpush2.bf16.msra.mxu0 0
      %983 = vmatprep.mubr.bf16.mxu0 0
      %984 = vmatmul.mubr.bf16.gmra.mxu0 %v872
      %v985 = vpop.f32.mrf.mxu0
      %v986 = vadd.f32 %v901, %v985
      %v987 = vpop.f32.mrf.mxu0
      %v988 = vpop.f32.mrf.mxu0
      %v989 = vadd.f32 %v901, %v988
      %v990 = vpop.f32.mrf.mxu0
      %991 = vmatprep.mubr.bf16.mxu0 0
      %992 = vmatmul.mubr.bf16.gmra.mxu0 %v873
      %v993 = vpop.f32.mrf.mxu0
      %v994 = vadd.f32 %v901, %v993
      %v995 = vpop.f32.mrf.mxu0
      %v996 = vpop.f32.mrf.mxu0
      %v997 = vadd.f32 %v901, %v996
      %v998 = vpop.f32.mrf.mxu0
      %999 = vmatprep.mubr.bf16.mxu0 0
      %1000 = vmatmul.mubr.bf16.gmra.mxu0 %v874
      %v1001 = vpop.f32.mrf.mxu0
      %v1002 = vadd.f32 %v901, %v1001
      %v1003 = vpop.f32.mrf.mxu0
      %v1004 = vpop.f32.mrf.mxu0
      %v1005 = vadd.f32 %v901, %v1004
      %v1006 = vpop.f32.mrf.mxu0
      %1007 = vmatprep.mubr.bf16.mxu0 0
      %1008 = vmatmul.mubr.bf16.gmra.mxu0 %v875
      %v1009 = vpop.f32.mrf.mxu0
      %v1010 = vadd.f32 %v901, %v1009
      %v1011 = vpop.f32.mrf.mxu0
      %v1012 = vpop.f32.mrf.mxu0
      %v1013 = vadd.f32 %v901, %v1012
      %v1014 = vpop.f32.mrf.mxu0
      %1015 = vmatprep.mubr.bf16.mxu0 0
      %1016 = vmatmul.mubr.bf16.gmra.mxu0 %v876
      %v1017 = vpop.f32.mrf.mxu0
      %v1018 = vadd.f32 %v901, %v1017
      %v1019 = vpop.f32.mrf.mxu0
      %v1020 = vpop.f32.mrf.mxu0
      %v1021 = vadd.f32 %v901, %v1020
      %v1022 = vpop.f32.mrf.mxu0
      %1023 = vmatprep.mubr.bf16.mxu0 0
      %1024 = vmatmul.mubr.bf16.gmra.mxu0 %v877
      %v1025 = vpop.f32.mrf.mxu0
      %v1026 = vadd.f32 %v901, %v1025
      %v1027 = vpop.f32.mrf.mxu0
      %v1028 = vpop.f32.mrf.mxu0
      %v1029 = vadd.f32 %v901, %v1028
      %v1030 = vpop.f32.mrf.mxu0
      %1031 = vmatprep.mubr.bf16.mxu0 0
      %1032 = vmatmul.mubr.bf16.gmra.mxu0 %v878
      %v1033 = vpop.f32.mrf.mxu0
      %v1034 = vadd.f32 %v901, %v1033
      %v1035 = vpop.f32.mrf.mxu0
      %v1036 = vpop.f32.mrf.mxu0
      %v1037 = vadd.f32 %v901, %v1036
      %v1038 = vpop.f32.mrf.mxu0
      %1039 = vmatprep.mubr.bf16.mxu0 0
      %1040 = vmatmul.mubr.bf16.gmra.mxu0 %v879
      %v1041 = vpop.f32.mrf.mxu0
      %v1042 = vadd.f32 %v901, %v1041
      %v1043 = vpop.f32.mrf.mxu0
      %v1044 = vpop.f32.mrf.mxu0
      %v1045 = vadd.f32 %v901, %v1044
      %v1046 = vpop.f32.mrf.mxu0
      %1047 = vdwg.mxu0
      %v1048 = vmax.f32 %v986, 0.0
      %v1049 = vmax.f32 %v989, 0.0
      %v1050 = vmax.f32 %v994, 0.0
      %v1051 = vmax.f32 %v997, 0.0
      %v1052 = vmax.f32 %v1002, 0.0
      %v1053 = vmax.f32 %v1005, 0.0
      %v1054 = vmax.f32 %v1010, 0.0
      %v1055 = vmax.f32 %v1013, 0.0
      %v1056 = vmax.f32 %v1018, 0.0
      %v1057 = vmax.f32 %v1021, 0.0
      %v1058 = vmax.f32 %v1026, 0.0
      %v1059 = vmax.f32 %v1029, 0.0
      %v1060 = vmax.f32 %v1034, 0.0
      %v1061 = vmax.f32 %v1037, 0.0
      %v1062 = vmax.f32 %v1042, 0.0
      %v1063 = vmax.f32 %v1045, 0.0
      %v1064 = vld [vmem:[%s2] sm:$0x1]
      %v1065 = vpack.c.bf16 %v1049, %v1048
      %v1066 = vpack.c.bf16 %v1051, %v1050
      %v1067 = vpack.c.bf16 %v1053, %v1052
      %v1068 = vpack.c.bf16 %v1055, %v1054
      %v1069 = vpack.c.bf16 %v1057, %v1056
      %v1070 = vpack.c.bf16 %v1059, %v1058
      %v1071 = vpack.c.bf16 %v1061, %v1060
      %v1072 = vpack.c.bf16 %v1063, %v1062
      %1073 = vmatprep.subr.bf16.mxu0 0
      %1074 = vmatpush1.bf16.msra.mxu0 %v1072
      %1075 = vmatprep.subr.bf16.mxu0 0
      %1076 = vmatpush1.bf16.msra.mxu0 %v1071
      %1077 = vmatprep.subr.bf16.mxu0 0
      %1078 = vmatpush1.bf16.msra.mxu0 %v1070
      %1079 = vmatprep.subr.bf16.mxu0 0
      %1080 = vmatpush1.bf16.msra.mxu0 %v1069
      %1081 = vmatprep.subr.bf16.mxu0 0
      %1082 = vmatpush1.bf16.msra.mxu0 %v1068
      %1083 = vmatprep.subr.bf16.mxu0 0
      %1084 = vmatpush1.bf16.msra.mxu0 %v1067
      %1085 = vmatprep.subr.bf16.mxu0 0
      %1086 = vmatpush1.bf16.msra.mxu0 %v1066
      %1087 = vmatprep.subr.bf16.mxu0 0
      %1088 = vmatpush1.bf16.msra.mxu0 %v1065
      %1089 = vmatprep.subr.bf16.mxu0 0
      %1090 = vmatpush2.bf16.msra.mxu0 0
      %1091 = vmatprep.subr.bf16.mxu0 0
      %1092 = vmatpush2.bf16.msra.mxu0 0
      %1093 = vmatprep.subr.bf16.mxu0 0
      %1094 = vmatpush2.bf16.msra.mxu0 0
      %1095 = vmatprep.subr.bf16.mxu0 0
      %1096 = vmatpush2.bf16.msra.mxu0 0
      %1097 = vmatprep.subr.bf16.mxu0 0
      %1098 = vmatpush2.bf16.msra.mxu0 0
      %1099 = vmatprep.subr.bf16.mxu0 0
      %1100 = vmatpush2.bf16.msra.mxu0 0
      %1101 = vmatprep.subr.bf16.mxu0 0
      %1102 = vmatpush2.bf16.msra.mxu0 0
      %1103 = vmatprep.subr.bf16.mxu0 0
      %1104 = vmatpush2.bf16.msra.mxu0 0
      %1105 = vmatprep.mubr.bf16.mxu0 0
      %1106 = vmatmul.mubr.bf16.gmra.mxu0 %v1064
      %v1107 = vpop.f32.mrf.mxu0
      %v1108 = vadd.f32 0.0, %v1107
      %v1109 = vpop.f32.mrf.mxu0
      %v1110 = vpop.f32.mrf.mxu0
      %v1111 = vpop.f32.mrf.mxu0
      %1112 = vdwg.mxu0
      %v1113 = vpack.c.bf16 %v1108, %v1108
      %v1114 = vld [vmem:[%s7] sm:$0xf]
      %v1115 = vld [vmem:[%s7 + $0x4] sm:$0xf]
      %v1116 = vld [vmem:[%s7 + $0x8] sm:$0xf]
      %v1117 = vld [vmem:[%s7 + $0xc] sm:$0xf]
      %v1118 = vld [vmem:[%s7 + $0x10] sm:$0xf]
      %v1119 = vld [vmem:[%s7 + $0x14] sm:$0xf]
      %v1120 = vld [vmem:[%s7 + $0x18] sm:$0xf]
      %v1121 = vld [vmem:[%s7 + $0x1c] sm:$0xf]
      %v1122 = vld [vmem:[%s7 + $0x20] sm:$0xf]
      %v1123 = vld [vmem:[%s7 + $0x24] sm:$0xf]
      %v1124 = vld [vmem:[%s7 + $0x28] sm:$0xf]
      %v1125 = vld [vmem:[%s7 + $0x2c] sm:$0xf]
      %v1126 = vld [vmem:[%s7 + $0x30] sm:$0xf]
      %v1127 = vld [vmem:[%s7 + $0x34] sm:$0xf]
      %v1128 = vld [vmem:[%s7 + $0x38] sm:$0xf]
      %v1129 = vld [vmem:[%s7 + $0x3c] sm:$0xf]
      %v1130 = vld [vmem:[%s8] sm:$0x1]
      %v1147 = vunpack.c.l.b16 %v1114
      %v1148 = vunpack.c.l.b16 %v1115
      %v1149 = vunpack.c.l.b16 %v1116
      %v1150 = vunpack.c.l.b16 %v1117
      %v1151 = vunpack.c.l.b16 %v1118
      %v1152 = vunpack.c.l.b16 %v1119
      %v1153 = vunpack.c.l.b16 %v1120
      %v1154 = vunpack.c.l.b16 %v1121
      %v1155 = vunpack.c.l.b16 %v1122
      %v1156 = vunpack.c.l.b16 %v1123
      %v1157 = vunpack.c.l.b16 %v1124
      %v1158 = vunpack.c.l.b16 %v1125
      %v1159 = vunpack.c.l.b16 %v1126
      %v1160 = vunpack.c.l.b16 %v1127
      %v1161 = vunpack.c.l.b16 %v1128
      %v1162 = vunpack.c.l.b16 %v1129
      %v1163 = vpack.c.b16 %v1148, %v1147
      %v1164 = vpack.c.b16 %v1150, %v1149
      %v1165 = vpack.c.b16 %v1152, %v1151
      %v1166 = vpack.c.b16 %v1154, %v1153
      %v1167 = vpack.c.b16 %v1156, %v1155
      %v1168 = vpack.c.b16 %v1158, %v1157
      %v1169 = vpack.c.b16 %v1160, %v1159
      %v1170 = vpack.c.b16 %v1162, %v1161
      %1179 = vmatprep.subr.bf16.mxu0 0
      %1180 = vmatpush1.bf16.msra.mxu0 %v1170
      %1181 = vmatprep.subr.bf16.mxu0 0
      %1182 = vmatpush1.bf16.msra.mxu0 %v1169
      %1183 = vmatprep.subr.bf16.mxu0 0
      %1184 = vmatpush1.bf16.msra.mxu0 %v1168
      %1185 = vmatprep.subr.bf16.mxu0 0
      %1186 = vmatpush1.bf16.msra.mxu0 %v1167
      %1187 = vmatprep.subr.bf16.mxu0 0
      %1188 = vmatpush1.bf16.msra.mxu0 %v1166
      %1189 = vmatprep.subr.bf16.mxu0 0
      %1190 = vmatpush1.bf16.msra.mxu0 %v1165
      %1191 = vmatprep.subr.bf16.mxu0 0
      %1192 = vmatpush1.bf16.msra.mxu0 %v1164
      %1193 = vmatprep.subr.bf16.mxu0 0
      %1194 = vmatpush1.bf16.msra.mxu0 %v1163
      %1195 = vmatprep.subr.bf16.mxu0 0
      %1196 = vmatpush2.bf16.msra.mxu0 0
      %1197 = vmatprep.subr.bf16.mxu0 0
      %1198 = vmatpush2.bf16.msra.mxu0 0
      %1199 = vmatprep.subr.bf16.mxu0 0
      %1200 = vmatpush2.bf16.msra.mxu0 0
      %1201 = vmatprep.subr.bf16.mxu0 0
      %1202 = vmatpush2.bf16.msra.mxu0 0
      %1203 = vmatprep.subr.bf16.mxu0 0
      %1204 = vmatpush2.bf16.msra.mxu0 0
      %1205 = vmatprep.subr.bf16.mxu0 0
      %1206 = vmatpush2.bf16.msra.mxu0 0
      %1207 = vmatprep.subr.bf16.mxu0 0
      %1208 = vmatpush2.bf16.msra.mxu0 0
      %1209 = vmatprep.subr.bf16.mxu0 0
      %1210 = vmatpush2.bf16.msra.mxu0 0
      %1211 = vmatprep.mubr.bf16.mxu0 0
      %1212 = vmatmul.mubr.bf16.gmra.mxu0 %v1113
      %v1213 = vpop.f32.mrf.mxu0
      %v1214 = vadd.f32 %v1130, %v1213
      %v1215 = vpop.f32.mrf.mxu0
      %v1216 = vpop.f32.mrf.mxu0
      %v1217 = vpop.f32.mrf.mxu0
      %1218 = vdwg.mxu0
      %vm1219 = vcmask 1040384
      %v1220 = vsel %vm1219, %v1214, -inf
      %1221 = vmax.xlane.f32.xlu0 %v1220
      %v1222 = vpop.xlane.xlu0 %1221
      %v1223 = vsub.f32 %v1214, %v1222
      %v1224 = vmul.f32 %v1223, 1.442695
      %v1225 = vpow.pop %v1224
      %v1226 = vsel %vm1219, %v1225, 0.0
      %1227 = vadd.xlane.f32.xlu0 %v1226
      %v1228 = vpop.xlane.xlu0 %1227
      %v1229 = vlog2.pop %v1228
      %v1230 = vmul.f32 %v1229, 0.6931472
      %v1231 = vadd.f32 %v1230, %v1222
      %v1232 = vsub.f32 %v1214, %v1231
      %1233 = vst [vmem:[%s348] sm:$0x1] %v1232
      %p1234 = scmp.lt.s32.totalorder %s20, 7
      %s1235 = scalar_select %p1234, %s20, 7
      %s1236 = scalar_lea.vmem %s9, %s1235
      // Predicated region
      $region57: #{brainnn_forward.1} parent=55 // pred_check
        %p1237 = pneg %p237
      $region58: #{brainnn_forward.1} parent=55 // pred_check_branch
        %1239 = sbr.rel (%p1237) target = $region60
      $region59: #{brainnn_forward.1} parent=55 // pred_region
        _
      $region60: #{brainnn_forward.1} parent=55 // pred_fallthru
        _
    $region56: #{brainnn_forward.1} parent=5 // pred_fallthru
      _
    %p1240 = scmp.le.s32.totalorder 2, %s15
    // Predicated region
    $region61: #{brainnn_forward.1} parent=5 // pred_check
      %p1241 = pneg %p1240
    $region62: #{brainnn_forward.1} parent=5 // pred_check_branch
      %1243 = sbr.rel (%p1241) target = $region64
    $region63: #{brainnn_forward.1} parent=5 // pred_region
      %s1244 = ssub.s32 %s15, 2
      // Predicated region
      $region65: #{brainnn_forward.1} parent=63 // pred_check
        %p1245 = pneg %p243
      $region66: #{brainnn_forward.1} parent=63 // pred_check_branch
        %1247 = sbr.rel (%p1245) target = $region68
      $region67: #{brainnn_forward.1} parent=63 // pred_region
        %p1248 = scmp.lt.s32.totalorder %s21, 7
        %s1249 = scalar_select %p1248, %s21, 7
        %s1250 = scalar_lea.vmem %s9, %s1249
      $region68: #{brainnn_forward.1} parent=63 // pred_fallthru
        _
    $region64: #{brainnn_forward.1} parent=5 // pred_fallthru
      _
  $region6: #{brainnn_forward.1} parent=0 // loop_footer
    %s19 = sadd.s32 1, %s15
  $region7: #{brainnn_forward.1} parent=0 // loop_footer_branch
    %14 = sbr.rel target = $region3
  $region8: #{brainnn_forward.1} parent=0 // loop_exit
    _

</llo_original>
